<compile_context>
chip_gen: v5e
topology: v5e:2x2
jax: 0.10.0
libtpu: 0.0.40
codegen_flags: <defaults>
</compile_context>

<pallas_src>
import functools

import jax
import jax.numpy as jnp
from jax.experimental import pallas as pl
from jax.experimental.pallas import tpu as pltpu


def _round_up(x, m):
    return (x + m - 1) // m * m


# ----------------------------------------------------------------------------
# Fused ResidualBlock kernel
# ----------------------------------------------------------------------------
def _residual_block_kernel(x_ref, w_ref, b_ref, o_ref, *, taps, apply_relu):
    # x_ref : (1, Cin, Lpad)     bf16  padded image, row-major flattened over
    #                                  (H+2)*(W+2), lane-padded to 128-multiple
    # w_ref : (9, Cout, Cin)     bf16  3x3 taps in (dy,dx) order; the 1x1
    #                                  shortcut is pre-folded into tap 4
    # b_ref : (Cout, 1)          f32   combined bias (b_conv + b_shortcut)
    # o_ref : (1, Cout, Lpad)    f32   output in the same padded-stride layout
    lpad = x_ref.shape[2]
    xv = x_ref[0].astype(jnp.float32)            # (Cin, Lpad), roll in f32
    acc = None
    for t, s in enumerate(taps):                 # 9 taps, statically unrolled
        # Tap operand: x shifted LEFT by s along the flattened spatial axis.
        # Wrapped / out-of-image columns only land in discarded output columns.
        xs = xv if s == 0 else pltpu.roll(xv, shift=lpad - s, axis=1)
        contrib = jnp.dot(w_ref[t], xs.astype(jnp.bfloat16),
                          preferred_element_type=jnp.float32)
        acc = contrib if acc is None else acc + contrib
    y = acc + b_ref[...]
    if apply_relu:
        y = jnp.maximum(y, 0.0)
    o_ref[...] = y[None].astype(o_ref.dtype)


# ----------------------------------------------------------------------------
# Wrapper: res = post_act(conv3x3(x) + conv1x1(x)), NCHW in / NCHW out.
# ----------------------------------------------------------------------------
def residual_block_forward(x_nchw, params, *, post_residual_relu=True):
    conv_p = params["conv"]
    shortcut_p = params["shortcut"]
    if conv_p is None:                            # PyTorch branch: res = x
        return x_nchw

    n, cin, h, w = x_nchw.shape
    w3, b3 = conv_p                               # (3,3,Cin,Cout), (Cout,)
    cout = w3.shape[-1]
    hp, wp = h + 2, w + 2
    lp = hp * wp                                  # flattened padded image size
    smax = 2 * wp + 2                             # largest tap shift (dy=dx=2)
    lpad = _round_up(lp + smax, 128)              # lane-dense, covers max shift

    # Padded image, flattened row-major, lane-padded, bf16 (halves HBM bytes).
    xp = jnp.pad(x_nchw, ((0, 0), (0, 0), (1, 1), (1, 1)))
    x_flat = jnp.pad(xp.reshape(n, cin, lp), ((0, 0), (0, 0), (0, lpad - lp)))
    x_flat = x_flat.astype(jnp.bfloat16)

    # Per-tap (Cout, Cin) weights; fold the 1x1 shortcut into the centre tap.
    has_shortcut = shortcut_p is not None
    w_taps = [w3[dy, dx].T for dy in range(3) for dx in range(3)]
    bias = b3
    if has_shortcut:
        ws, bs = shortcut_p                       # (Cin, Cout), (Cout,)
        w_taps[4] = w_taps[4] + ws.T              # centre tap (dy=1, dx=1)
        bias = bias + bs
    w_stack = jnp.stack(w_taps, axis=0).astype(jnp.bfloat16)   # (9, Cout, Cin)
    bias = bias.reshape(cout, 1).astype(jnp.float32)

    # Per the PyTorch module, the post-residual act only fires on the
    # conv+shortcut branch.
    apply_relu = post_residual_relu and has_shortcut
    taps = tuple(dy * wp + dx for dy in range(3) for dx in range(3))

    out = pl.pallas_call(
        functools.partial(_residual_block_kernel, taps=taps,
                          apply_relu=apply_relu),
        out_shape=jax.ShapeDtypeStruct((n, cout, lpad), jnp.float32),
        grid=(n,),
        in_specs=[
            pl.BlockSpec((1, cin, lpad), lambda i: (i, 0, 0)),
            pl.BlockSpec((9, cout, cin), lambda i: (0, 0, 0)),
            pl.BlockSpec((cout, 1), lambda i: (0, 0)),
        ],
        out_specs=pl.BlockSpec((1, cout, lpad), lambda i: (i, 0, 0)),
        compiler_params=pltpu.CompilerParams(
            dimension_semantics=("parallel",)),
    )(x_flat, w_stack, bias)

    # Valid output columns are q = y*(W+2) + x for y < H, x < W; drop the rest.
    out = out[:, :, :lp].reshape(n, cout, hp, wp)[:, :, :h, :w]
    return out.astype(x_nchw.dtype)


# ----------------------------------------------------------------------------
# Pure-JAX reference (f32 end to end)
# ----------------------------------------------------------------------------
def ref_residual_block(x_nchw, params, *, post_residual_relu=True):
    conv_p = params["conv"]
    shortcut_p = params["shortcut"]
    if conv_p is None:
        return x_nchw
    w3, b3 = conv_p
    x = jnp.transpose(x_nchw, (0, 2, 3, 1))                 # NHWC
    n, h, w, cin = x.shape
    cout = w3.shape[-1]
    xp = jnp.pad(x, ((0, 0), (1, 1), (1, 1), (0, 0)))
    acc = jnp.zeros((n, h, w, cout), jnp.float32)
    for dy in range(3):
        for dx in range(3):
            acc = acc + jnp.einsum("nhwc,cd->nhwd",
                                   xp[:, dy:dy + h, dx:dx + w, :], w3[dy, dx])
    res = acc + b3
    if shortcut_p is not None:
        ws, bs = shortcut_p
        res = res + jnp.einsum("nhwc,cd->nhwd", x, ws) + bs
        if post_residual_relu:
            res = jnp.maximum(res, 0.0)
    return jnp.transpose(res, (0, 3, 1, 2))                  # NCHW


# ----------------------------------------------------------------------------
# Main
# ----------------------------------------------------------------------------
if __name__ == "__main__":
    root = jax.random.PRNGKey(0)
    k_x, kw3, kb3, kws, kbs = jax.random.split(root, 5)

    cin, cout = 4, 16
    x = jax.random.normal(k_x, (2, cin, 16, 16), jnp.float32)    # NCHW
    params = {
        "conv": (
            jax.random.normal(kw3, (3, 3, cin, cout), jnp.float32) * 0.1,
            jax.random.normal(kb3, (cout,), jnp.float32) * 0.05,
        ),
        "shortcut": (
            jax.random.normal(kws, (cin, cout), jnp.float32) * 0.1,
            jax.random.normal(kbs, (cout,), jnp.float32) * 0.05,
        ),
    }

    # conv + shortcut + ReLU path
    out = jax.block_until_ready(jax.jit(residual_block_forward)(x, params))
    ref = ref_residual_block(x, params)
    assert out.shape == ref.shape, (out.shape, ref.shape)
    # bf16 MXU operands with f32 accumulation -> ~1e-3 level error.
    assert jnp.allclose(out, ref, atol=2e-2, rtol=2e-2), float(
        jnp.max(jnp.abs(out - ref)))

    # conv-only path (shortcut=None -> no residual add, no post-act)
    params_conv_only = {"conv": params["conv"], "shortcut": None}
    out2 = jax.block_until_ready(
        jax.jit(residual_block_forward)(x, params_conv_only))
    ref2 = ref_residual_block(x, params_conv_only)
    assert jnp.allclose(out2, ref2, atol=2e-2, rtol=2e-2), float(
        jnp.max(jnp.abs(out2 - ref2)))

    print("KERNEL_OK")
</pallas_src>

<mosaic_0001>
module attributes {stable_mosaic.version = 11 : i64} {
  func.func @_residual_block_kernel(%arg0: i32, %arg1: memref<1x4x384xbf16, #tpu.memory_space<vmem>>, %arg2: memref<9x16x4xbf16, #tpu.memory_space<vmem>>, %arg3: memref<16x1xf32, #tpu.memory_space<vmem>>, %arg4: memref<1x16x384xf32, #tpu.memory_space<vmem>>) attributes {dimension_semantics = [#tpu.dimension_semantics<parallel>], iteration_bounds = array<i64: 2>, scalar_prefetch = 0 : i64, scratch_operands = 0 : i64, tpu.core_type = #tpu.core_type<tc>, window_params = [{transform_indices = @transform_0, window_bounds = array<i64: 1, 4, 384>}, {pipeline_mode = #tpu.pipeline_mode<synchronous>, transform_indices = @transform_1, window_bounds = array<i64: 9, 16, 4>}, {pipeline_mode = #tpu.pipeline_mode<synchronous>, transform_indices = @transform_2, window_bounds = array<i64: 16, 1>}, {transform_indices = @transform_3, window_bounds = array<i64: 1, 16, 384>}]} {
    %c0 = arith.constant 0 : index
    %c0_0 = arith.constant 0 : index
    %c0_1 = arith.constant 0 : index
    %0 = vector.load %arg1[%c0, %c0_0, %c0_1] : memref<1x4x384xbf16, #tpu.memory_space<vmem>>, vector<1x4x384xbf16>
    %1 = vector.shape_cast %0 : vector<1x4x384xbf16> to vector<4x384xbf16>
    %2 = arith.extf %1 : vector<4x384xbf16> to vector<4x384xf32>
    %c0_2 = arith.constant 0 : index
    %c0_3 = arith.constant 0 : index
    %c0_4 = arith.constant 0 : index
    %3 = vector.load %arg2[%c0_2, %c0_3, %c0_4] : memref<9x16x4xbf16, #tpu.memory_space<vmem>>, vector<1x16x4xbf16>
    %4 = vector.shape_cast %3 : vector<1x16x4xbf16> to vector<16x4xbf16>
    %5 = arith.truncf %2 : vector<4x384xf32> to vector<4x384xbf16>
    %cst = arith.constant dense<0.000000e+00> : vector<16x384xf32>
    %6 = tpu.matmul %4, %5, %cst {dimension_numbers = #tpu.dot_dimension_numbers<[1], [0], [0], [1], [0, 0, 1, 1], [], []>} : vector<16x4xbf16>, vector<4x384xbf16>, vector<16x384xf32> -> vector<16x384xf32>
    %c383_i32 = arith.constant 383 : i32
    %7 = tpu.dynamic_rotate %2 by %c383_i32 dim 1 : vector<4x384xf32>, i32 -> vector<4x384xf32>
    %c1 = arith.constant 1 : index
    %c0_5 = arith.constant 0 : index
    %c0_6 = arith.constant 0 : index
    %8 = vector.load %arg2[%c1, %c0_5, %c0_6] : memref<9x16x4xbf16, #tpu.memory_space<vmem>>, vector<1x16x4xbf16>
    %9 = vector.shape_cast %8 : vector<1x16x4xbf16> to vector<16x4xbf16>
    %10 = arith.truncf %7 : vector<4x384xf32> to vector<4x384xbf16>
    %cst_7 = arith.constant dense<0.000000e+00> : vector<16x384xf32>
    %11 = tpu.matmul %9, %10, %cst_7 {dimension_numbers = #tpu.dot_dimension_numbers<[1], [0], [0], [1], [0, 0, 1, 1], [], []>} : vector<16x4xbf16>, vector<4x384xbf16>, vector<16x384xf32> -> vector<16x384xf32>
    %12 = arith.addf %6, %11 : vector<16x384xf32>
    %c382_i32 = arith.constant 382 : i32
    %13 = tpu.dynamic_rotate %2 by %c382_i32 dim 1 : vector<4x384xf32>, i32 -> vector<4x384xf32>
    %c2 = arith.constant 2 : index
    %c0_8 = arith.constant 0 : index
    %c0_9 = arith.constant 0 : index
    %14 = vector.load %arg2[%c2, %c0_8, %c0_9] : memref<9x16x4xbf16, #tpu.memory_space<vmem>>, vector<1x16x4xbf16>
    %15 = vector.shape_cast %14 : vector<1x16x4xbf16> to vector<16x4xbf16>
    %16 = arith.truncf %13 : vector<4x384xf32> to vector<4x384xbf16>
    %cst_10 = arith.constant dense<0.000000e+00> : vector<16x384xf32>
    %17 = tpu.matmul %15, %16, %cst_10 {dimension_numbers = #tpu.dot_dimension_numbers<[1], [0], [0], [1], [0, 0, 1, 1], [], []>} : vector<16x4xbf16>, vector<4x384xbf16>, vector<16x384xf32> -> vector<16x384xf32>
    %18 = arith.addf %12, %17 : vector<16x384xf32>
    %c366_i32 = arith.constant 366 : i32
    %19 = tpu.dynamic_rotate %2 by %c366_i32 dim 1 : vector<4x384xf32>, i32 -> vector<4x384xf32>
    %c3 = arith.constant 3 : index
    %c0_11 = arith.constant 0 : index
    %c0_12 = arith.constant 0 : index
    %20 = vector.load %arg2[%c3, %c0_11, %c0_12] : memref<9x16x4xbf16, #tpu.memory_space<vmem>>, vector<1x16x4xbf16>
    %21 = vector.shape_cast %20 : vector<1x16x4xbf16> to vector<16x4xbf16>
    %22 = arith.truncf %19 : vector<4x384xf32> to vector<4x384xbf16>
    %cst_13 = arith.constant dense<0.000000e+00> : vector<16x384xf32>
    %23 = tpu.matmul %21, %22, %cst_13 {dimension_numbers = #tpu.dot_dimension_numbers<[1], [0], [0], [1], [0, 0, 1, 1], [], []>} : vector<16x4xbf16>, vector<4x384xbf16>, vector<16x384xf32> -> vector<16x384xf32>
    %24 = arith.addf %18, %23 : vector<16x384xf32>
    %c365_i32 = arith.constant 365 : i32
    %25 = tpu.dynamic_rotate %2 by %c365_i32 dim 1 : vector<4x384xf32>, i32 -> vector<4x384xf32>
    %c4 = arith.constant 4 : index
    %c0_14 = arith.constant 0 : index
    %c0_15 = arith.constant 0 : index
    %26 = vector.load %arg2[%c4, %c0_14, %c0_15] : memref<9x16x4xbf16, #tpu.memory_space<vmem>>, vector<1x16x4xbf16>
    %27 = vector.shape_cast %26 : vector<1x16x4xbf16> to vector<16x4xbf16>
    %28 = arith.truncf %25 : vector<4x384xf32> to vector<4x384xbf16>
    %cst_16 = arith.constant dense<0.000000e+00> : vector<16x384xf32>
    %29 = tpu.matmul %27, %28, %cst_16 {dimension_numbers = #tpu.dot_dimension_numbers<[1], [0], [0], [1], [0, 0, 1, 1], [], []>} : vector<16x4xbf16>, vector<4x384xbf16>, vector<16x384xf32> -> vector<16x384xf32>
    %30 = arith.addf %24, %29 : vector<16x384xf32>
    %c364_i32 = arith.constant 364 : i32
    %31 = tpu.dynamic_rotate %2 by %c364_i32 dim 1 : vector<4x384xf32>, i32 -> vector<4x384xf32>
    %c5 = arith.constant 5 : index
    %c0_17 = arith.constant 0 : index
    %c0_18 = arith.constant 0 : index
    %32 = vector.load %arg2[%c5, %c0_17, %c0_18] : memref<9x16x4xbf16, #tpu.memory_space<vmem>>, vector<1x16x4xbf16>
    %33 = vector.shape_cast %32 : vector<1x16x4xbf16> to vector<16x4xbf16>
    %34 = arith.truncf %31 : vector<4x384xf32> to vector<4x384xbf16>
    %cst_19 = arith.constant dense<0.000000e+00> : vector<16x384xf32>
    %35 = tpu.matmul %33, %34, %cst_19 {dimension_numbers = #tpu.dot_dimension_numbers<[1], [0], [0], [1], [0, 0, 1, 1], [], []>} : vector<16x4xbf16>, vector<4x384xbf16>, vector<16x384xf32> -> vector<16x384xf32>
    %36 = arith.addf %30, %35 : vector<16x384xf32>
    %c348_i32 = arith.constant 348 : i32
    %37 = tpu.dynamic_rotate %2 by %c348_i32 dim 1 : vector<4x384xf32>, i32 -> vector<4x384xf32>
    %c6 = arith.constant 6 : index
    %c0_20 = arith.constant 0 : index
    %c0_21 = arith.constant 0 : index
    %38 = vector.load %arg2[%c6, %c0_20, %c0_21] : memref<9x16x4xbf16, #tpu.memory_space<vmem>>, vector<1x16x4xbf16>
    %39 = vector.shape_cast %38 : vector<1x16x4xbf16> to vector<16x4xbf16>
    %40 = arith.truncf %37 : vector<4x384xf32> to vector<4x384xbf16>
    %cst_22 = arith.constant dense<0.000000e+00> : vector<16x384xf32>
    %41 = tpu.matmul %39, %40, %cst_22 {dimension_numbers = #tpu.dot_dimension_numbers<[1], [0], [0], [1], [0, 0, 1, 1], [], []>} : vector<16x4xbf16>, vector<4x384xbf16>, vector<16x384xf32> -> vector<16x384xf32>
    %42 = arith.addf %36, %41 : vector<16x384xf32>
    %c347_i32 = arith.constant 347 : i32
    %43 = tpu.dynamic_rotate %2 by %c347_i32 dim 1 : vector<4x384xf32>, i32 -> vector<4x384xf32>
    %c7 = arith.constant 7 : index
    %c0_23 = arith.constant 0 : index
    %c0_24 = arith.constant 0 : index
    %44 = vector.load %arg2[%c7, %c0_23, %c0_24] : memref<9x16x4xbf16, #tpu.memory_space<vmem>>, vector<1x16x4xbf16>
    %45 = vector.shape_cast %44 : vector<1x16x4xbf16> to vector<16x4xbf16>
    %46 = arith.truncf %43 : vector<4x384xf32> to vector<4x384xbf16>
    %cst_25 = arith.constant dense<0.000000e+00> : vector<16x384xf32>
    %47 = tpu.matmul %45, %46, %cst_25 {dimension_numbers = #tpu.dot_dimension_numbers<[1], [0], [0], [1], [0, 0, 1, 1], [], []>} : vector<16x4xbf16>, vector<4x384xbf16>, vector<16x384xf32> -> vector<16x384xf32>
    %48 = arith.addf %42, %47 : vector<16x384xf32>
    %c346_i32 = arith.constant 346 : i32
    %49 = tpu.dynamic_rotate %2 by %c346_i32 dim 1 : vector<4x384xf32>, i32 -> vector<4x384xf32>
    %c8 = arith.constant 8 : index
    %c0_26 = arith.constant 0 : index
    %c0_27 = arith.constant 0 : index
    %50 = vector.load %arg2[%c8, %c0_26, %c0_27] : memref<9x16x4xbf16, #tpu.memory_space<vmem>>, vector<1x16x4xbf16>
    %51 = vector.shape_cast %50 : vector<1x16x4xbf16> to vector<16x4xbf16>
    %52 = arith.truncf %49 : vector<4x384xf32> to vector<4x384xbf16>
    %cst_28 = arith.constant dense<0.000000e+00> : vector<16x384xf32>
    %53 = tpu.matmul %51, %52, %cst_28 {dimension_numbers = #tpu.dot_dimension_numbers<[1], [0], [0], [1], [0, 0, 1, 1], [], []>} : vector<16x4xbf16>, vector<4x384xbf16>, vector<16x384xf32> -> vector<16x384xf32>
    %54 = arith.addf %48, %53 : vector<16x384xf32>
    %c0_29 = arith.constant 0 : index
    %c0_30 = arith.constant 0 : index
    %55 = vector.load %arg3[%c0_29, %c0_30] : memref<16x1xf32, #tpu.memory_space<vmem>>, vector<16x1xf32>
    %56 = vector.broadcast %55 : vector<16x1xf32> to vector<16x384xf32>
    %57 = arith.addf %54, %56 : vector<16x384xf32>
    %cst_31 = arith.constant 0.000000e+00 : f32
    %58 = vector.broadcast %cst_31 : f32 to vector<16x384xf32>
    %59 = arith.maximumf %57, %58 : vector<16x384xf32>
    %60 = vector.shape_cast %59 : vector<16x384xf32> to vector<1x16x384xf32>
    %c0_32 = arith.constant 0 : index
    %c0_33 = arith.constant 0 : index
    %c0_34 = arith.constant 0 : index
    %61 = vector.load %arg4[%c0_32, %c0_33, %c0_34] : memref<1x16x384xf32, #tpu.memory_space<vmem>>, vector<1x16x384xf32>
    tpu.vector_store %arg4[%c0_32, %c0_33, %c0_34], %60 {strides = array<i32>} : memref<1x16x384xf32, #tpu.memory_space<vmem>>, vector<1x16x384xf32>,
    return
  }
  func.func @transform_0(%arg0: i32) -> (i32, i32, i32) {
    %c0_i32 = arith.constant 0 : i32
    %c0_i32_0 = arith.constant 0 : i32
    %c0_i32_1 = arith.constant 0 : i32
    return %arg0, %c0_i32, %c0_i32_0 : i32, i32, i32
  }
  func.func @transform_1(%arg0: i32) -> (i32, i32, i32) {
    %c0_i32 = arith.constant 0 : i32
    %c0_i32_0 = arith.constant 0 : i32
    %c0_i32_1 = arith.constant 0 : i32
    %c0_i32_2 = arith.constant 0 : i32
    return %c0_i32, %c0_i32_0, %c0_i32_1 : i32, i32, i32
  }
  func.func @transform_2(%arg0: i32) -> (i32, i32) {
    %c0_i32 = arith.constant 0 : i32
    %c0_i32_0 = arith.constant 0 : i32
    %c0_i32_1 = arith.constant 0 : i32
    return %c0_i32, %c0_i32_0 : i32, i32
  }
  func.func @transform_3(%arg0: i32) -> (i32, i32, i32) {
    %c0_i32 = arith.constant 0 : i32
    %c0_i32_0 = arith.constant 0 : i32
    %c0_i32_1 = arith.constant 0 : i32
    return %arg0, %c0_i32, %c0_i32_0 : i32, i32, i32
  }
}

</mosaic_0001>

<llo_original>
// kernel: residual_block_forward.1
$region0: #{residual_block_forward.1}
  #allocation0 [shape = 'u32[]', space=smem, size = 0x4, offset = 0x4, fixed_abs, tag = 'smem constant byte address 0x4 - core index']
  #allocation1 [shape = 'u32[72,128]{1,0:T(1,128)}', space=vmem, size = 0x9000, scoped, tag = 'internal scratch']
  %s0 = inlined_call_operand.vmem [shape: bf16[2,4,384], index: 0, kind: input, shape index: {}]
  %s1 = inlined_call_operand.vmem [shape: bf16[9,16,4], index: 1, kind: input, shape index: {}]
  %s2 = inlined_call_operand.vmem [shape: f32[16,1], index: 2, kind: input, shape index: {}]
  %s3 = inlined_call_operand.vmem [shape: f32[2,16,384], index: 3, kind: output, shape index: {}]
  %s4 = sld [smem:[#allocation0]]
  $region45: #{residual_block_forward.1} parent=0
    _
  %s6 = ssub.s32 1, %s4
  %s7 = scalar_select 0, %s6, %s4
  loop: start=0, step=1, limit=4
  $region2: #{residual_block_forward.1} parent=0 // loop_pre_header
    _
  $region3: #{residual_block_forward.1} parent=0 // loop_header
    %s9 = sphi 0, %s13
    %p10 = scmp.ge.s32.totalorder %s9, 4
    %s19 = sphi 0, %s21
    %s22 = sphi 0, %s19
    %s23 = sphi 0, %s22
    %s39 = sphi 0, %s23
    %s43 = sphi 0, %s43
    %s45 = sphi 0, %s43
    %s46 = sphi 0, %s45
    %s60 = sphi 0, %s46
    %s64 = sphi 0, %s64
    %s66 = sphi 0, %s64
    %s67 = sphi 0, %s66
    %s81 = sphi 0, %s67
    %s87 = sphi 0, %s89
    %s90 = sphi 0, %s87
    %s91 = sphi 0, %s90
    %s107 = sphi 0, %s91
  $region4: #{residual_block_forward.1} parent=0 // loop_header_branch
    %12 = sbr.rel (%p10) target = $region8
  $region5: #{residual_block_forward.1} parent=0 // loop_body
    %s14 = ssub.s32 %s9, 1
    %s15 = ssub.s32 %s9, 2
    %s16 = sadd.s32 %s9, 1
    %s17 = ssub.s32 %s9, %s16
    %p18 = scmp.eq.s32.totalorder %s17, 0
    %s20 = sadd.s32 %s19, 1
    %s21 = scalar_select %p18, %s19, %s20
    %p24 = pneg %p18
    %p25 = scmp.eq.s32.totalorder %s9, 1
    %p26 = por %p24, %p25
    %p27 = scmp.ne.s32.totalorder %s19, %s22
    %p28 = scmp.eq.s32.totalorder %s9, 0
    %p29 = por %p27, %p28
    %p30 = scmp.ne.s32.totalorder %s19, %s22
    %p31 = scmp.eq.s32.totalorder %s14, 1
    %p32 = por %p30, %p31
    %p33 = scmp.ne.s32.totalorder %s22, %s23
    %p34 = scmp.eq.s32.totalorder %s14, 0
    %p35 = por %p33, %p34
    %p36 = scmp.ne.s32.totalorder %s22, %s23
    %p37 = scmp.eq.s32.totalorder %s15, 1
    %p38 = por %p36, %p37
    %p40 = scmp.ne.s32.totalorder %s23, %s39
    %p41 = scmp.eq.s32.totalorder %s15, 0
    %p42 = por %p40, %p41
    %s44 = sadd.s32 %s43, 1
    %p47 = scmp.eq.s32.totalorder %s9, 1
    %p48 = scmp.ne.s32.totalorder %s43, %s45
    %p49 = scmp.eq.s32.totalorder %s9, 0
    %p50 = por %p48, %p49
    %p51 = scmp.ne.s32.totalorder %s43, %s45
    %p52 = scmp.eq.s32.totalorder %s14, 1
    %p53 = por %p51, %p52
    %p54 = scmp.ne.s32.totalorder %s45, %s46
    %p55 = scmp.eq.s32.totalorder %s14, 0
    %p56 = por %p54, %p55
    %p57 = scmp.ne.s32.totalorder %s45, %s46
    %p58 = scmp.eq.s32.totalorder %s15, 1
    %p59 = por %p57, %p58
    %p61 = scmp.ne.s32.totalorder %s46, %s60
    %p62 = scmp.eq.s32.totalorder %s15, 0
    %p63 = por %p61, %p62
    %s65 = sadd.s32 %s64, 1
    %p68 = scmp.eq.s32.totalorder %s9, 1
    %p69 = scmp.ne.s32.totalorder %s64, %s66
    %p70 = scmp.eq.s32.totalorder %s9, 0
    %p71 = por %p69, %p70
    %p72 = scmp.ne.s32.totalorder %s64, %s66
    %p73 = scmp.eq.s32.totalorder %s14, 1
    %p74 = por %p72, %p73
    %p75 = scmp.ne.s32.totalorder %s66, %s67
    %p76 = scmp.eq.s32.totalorder %s14, 0
    %p77 = por %p75, %p76
    %p78 = scmp.ne.s32.totalorder %s66, %s67
    %p79 = scmp.eq.s32.totalorder %s15, 1
    %p80 = por %p78, %p79
    %p82 = scmp.ne.s32.totalorder %s67, %s81
    %p83 = scmp.eq.s32.totalorder %s15, 0
    %p84 = por %p82, %p83
    %s85 = ssub.s32 %s9, %s16
    %p86 = scmp.eq.s32.totalorder %s85, 0
    %s88 = sadd.s32 %s87, 1
    %s89 = scalar_select %p86, %s87, %s88
    %p92 = pneg %p86
    %p93 = scmp.eq.s32.totalorder %s9, 1
    %p94 = por %p92, %p93
    %p95 = scmp.ne.s32.totalorder %s87, %s90
    %p96 = scmp.eq.s32.totalorder %s9, 0
    %p97 = por %p95, %p96
    %p98 = scmp.ne.s32.totalorder %s87, %s90
    %p99 = scmp.eq.s32.totalorder %s14, 1
    %p100 = por %p98, %p99
    %p101 = scmp.ne.s32.totalorder %s90, %s91
    %p102 = scmp.eq.s32.totalorder %s14, 0
    %p103 = por %p101, %p102
    %p104 = scmp.ne.s32.totalorder %s90, %s91
    %p105 = scmp.eq.s32.totalorder %s15, 1
    %p106 = por %p104, %p105
    %p108 = scmp.ne.s32.totalorder %s91, %s107
    %p109 = scmp.eq.s32.totalorder %s15, 0
    %p110 = por %p108, %p109
    %p111 = scmp.le.s32.totalorder 1, %s9
    %p112 = scmp.lt.s32.totalorder %s9, 3
    %p113 = pnand %p111, %p112
    %p114 = pneg %p113
    // Predicated region
    $region9: #{residual_block_forward.1} parent=5 // pred_check
      _
    $region10: #{residual_block_forward.1} parent=5 // pred_check_branch
      %116 = sbr.rel (%p113) target = $region12
    $region11: #{residual_block_forward.1} parent=5 // pred_region
      %s117 = ssub.s32 %s9, 1
      // Predicated region
      $region13: #{residual_block_forward.1} parent=11 // pred_check
        %p118 = pneg %p56
      $region14: #{residual_block_forward.1} parent=11 // pred_check_branch
        %120 = sbr.rel (%p118) target = $region16
      $region15: #{residual_block_forward.1} parent=11 // pred_region
        _
      $region16: #{residual_block_forward.1} parent=11 // pred_fallthru
        _
      // Predicated region
      $region17: #{residual_block_forward.1} parent=11 // pred_check
        %p121 = pneg %p77
      $region18: #{residual_block_forward.1} parent=11 // pred_check_branch
        %123 = sbr.rel (%p121) target = $region20
      $region19: #{residual_block_forward.1} parent=11 // pred_region
        _
      $region20: #{residual_block_forward.1} parent=11 // pred_fallthru
        _
    $region12: #{residual_block_forward.1} parent=5 // pred_fallthru
      _
    %p124 = scmp.lt.s32.totalorder %s9, 2
    // Predicated region
    $region21: #{residual_block_forward.1} parent=5 // pred_check
      %p125 = pneg %p124
    $region22: #{residual_block_forward.1} parent=5 // pred_check_branch
      %127 = sbr.rel (%p125) target = $region24
    $region23: #{residual_block_forward.1} parent=5 // pred_region
      // Predicated region
      $region25: #{residual_block_forward.1} parent=23 // pred_check
        %p128 = pneg %p29
      $region26: #{residual_block_forward.1} parent=23 // pred_check_branch
        %130 = sbr.rel (%p128) target = $region28
      $region27: #{residual_block_forward.1} parent=23 // pred_region
        %p131 = scmp.lt.s32.totalorder %s9, 1
        %s132 = scalar_select %p131, %s9, 1
        %s133 = smul.addr %s132, 3
        %s134 = smul.addr %s133, 2
        %s135 = scalar_lea.vmem %s0, %s134
      $region28: #{residual_block_forward.1} parent=23 // pred_fallthru
        _
    $region24: #{residual_block_forward.1} parent=5 // pred_fallthru
      _
    %p136 = scmp.le.s32.totalorder 1, %s9
    %p137 = scmp.lt.s32.totalorder %s9, 3
    %p138 = pnand %p136, %p137
    %p139 = pneg %p138
    // Predicated region
    $region29: #{residual_block_forward.1} parent=5 // pred_check
      _
    $region30: #{residual_block_forward.1} parent=5 // pred_check_branch
      %141 = sbr.rel (%p138) target = $region32
    $region31: #{residual_block_forward.1} parent=5 // pred_region
      %s142 = ssub.s32 %s9, 1
      %p143 = scmp.lt.s32.totalorder %s14, 1
      %s144 = scalar_select %p143, %s14, 1
      %s145 = smul.addr %s144, 3
      %s146 = smul.addr %s145, 2
      %s147 = scalar_lea.vmem %s0, %s146
      %p148 = pneg %p35
      %p149 = pneg %p32
      %p150 = pneg %p56
      %p151 = pneg %p53
      %p152 = pneg %p77
      %p153 = pneg %p74
      %p154 = pneg %p103
      %p155 = pneg %p100
      %p156 = scmp.lt.s32.totalorder %s14, 1
      %s157 = scalar_select %p156, %s14, 1
      %s158 = smul.addr %s157, 6
      %s159 = smul.addr %s158, 8
      %s160 = scalar_lea.vmem %s3, %s159
      %p161 = scmp.lt.s32.totalorder %s14, 1
      %s162 = scalar_select %p161, %s14, 1
      %s163 = smul.addr %s162, 3
      %s164 = smul.addr %s163, 2
      %s165 = scalar_lea.vmem %s0, %s164
      %p166 = scmp.lt.s32.totalorder %s14, 1
      %s167 = scalar_select %p166, %s14, 1
      %s168 = smul.addr %s167, 6
      %s169 = smul.addr %s168, 8
      %s170 = scalar_lea.vmem %s3, %s169
      %v172 = vld [vmem:[%s165] sm:$0x3f]
      %v173 = vunpack.c.l.bf16 %v172
      %v174 = vunpack.c.h.bf16 %v172
      %v175 = vld [vmem:[%s1] sm:$0xf]
      %v176 = vld [vmem:[%s1 + $0x4] sm:$0xf]
      %179 = vst [vmem:[#allocation1] ss:$2 sm:$0xff] %v173
      %s180 = scalar_lea.vmem [#allocation1], 16
      %181 = vst [vmem:[%s180] ss:$2 sm:$0xff] %v174
      %v182 = vld.sshfl [vmem:[#allocation1] sm:$0xff pattern:$0x75316420]
      %v183 = vld.sshfl [vmem:[#allocation1 + $0x8] sm:$0xff pattern:$0x75316420]
      %v184 = vld.sshfl [vmem:[#allocation1 + $0x10] sm:$0xff pattern:$0x75316420]
      %188 = vrot.lane.b32.xlu0 %v182, 127
      %v189 = vpop.permute.xlu0 %188
      %190 = vrot.lane.b32.xlu0 %v183, 127
      %v191 = vpop.permute.xlu0 %190
      %192 = vrot.lane.b32.xlu0 %v184, 127
      %v193 = vpop.permute.xlu0 %192
      %v194 = vlaneseq
      %v195 = vand.u32 %v194, 127
      %vm196 = vcmp.lt.s32.totalorder %v195, 127
      %v197 = vsel %vm196, %v191, %v193
      %v198 = vsel %vm196, %v189, %v191
      %v199 = vsel %vm196, %v193, %v189
      %s200 = scalar_lea.vmem %s1, 8
      %v201 = vld [vmem:[%s200] sm:$0xf]
      %v202 = vld [vmem:[%s200 + $0x4] sm:$0xf]
      %v203 = vpack.c.bf16 %v198, %v198
      %v204 = vpack.c.bf16 %v197, %v197
      %v205 = vpack.c.bf16 %v199, %v199
      %v208 = vunpack.c.l.b16 %v201
      %v209 = vunpack.c.l.b16 %v202
      %v210 = vpack.c.b16 %v209, %v208
      %vm211 = vcmask 31744
      %v213 = vsel %vm211, %v210, 0
      %vm215 = vcmask 1041408
      %v217 = vsel %vm215, %v203, 0
      %v220 = vsel %vm215, %v204, 0
      %v223 = vsel %vm215, %v205, 0
      %225 = vmatpush.bf16.msra.mxu0 0
      %226 = vmatpush.bf16.msra.mxu0 0
      %227 = vmatpush.bf16.msra.mxu0 0
      %228 = vmatpush.bf16.msra.mxu0 0
      %229 = vmatpush.bf16.msra.mxu0 0
      %230 = vmatpush.bf16.msra.mxu0 0
      %231 = vmatpush.bf16.msra.mxu0 0
      %232 = vmatpush.bf16.msra.mxu0 %v217
      %233 = vmatmul.bf16.gmra.mxu0 %v213
      %v234 = vpop.f32.mrf.mxu0
      %v235 = vadd.f32 0.0, %v234
      %v236 = vpop.f32.mrf.mxu0
      %v237 = vadd.f32 0.0, %v236
      %238 = vdwg.mxu0
      %239 = vmatpush.bf16.msra.mxu0 0
      %240 = vmatpush.bf16.msra.mxu0 0
      %241 = vmatpush.bf16.msra.mxu0 0
      %242 = vmatpush.bf16.msra.mxu0 0
      %243 = vmatpush.bf16.msra.mxu0 0
      %244 = vmatpush.bf16.msra.mxu0 0
      %245 = vmatpush.bf16.msra.mxu0 0
      %246 = vmatpush.bf16.msra.mxu0 %v220
      %247 = vmatmul.bf16.gmra.mxu0 %v213
      %v248 = vpop.f32.mrf.mxu0
      %v249 = vadd.f32 0.0, %v248
      %v250 = vpop.f32.mrf.mxu0
      %v251 = vadd.f32 0.0, %v250
      %252 = vdwg.mxu0
      %253 = vmatpush.bf16.msra.mxu0 0
      %254 = vmatpush.bf16.msra.mxu0 0
      %255 = vmatpush.bf16.msra.mxu0 0
      %256 = vmatpush.bf16.msra.mxu0 0
      %257 = vmatpush.bf16.msra.mxu0 0
      %258 = vmatpush.bf16.msra.mxu0 0
      %259 = vmatpush.bf16.msra.mxu0 0
      %260 = vmatpush.bf16.msra.mxu0 %v223
      %261 = vmatmul.bf16.gmra.mxu0 %v213
      %v262 = vpop.f32.mrf.mxu0
      %v263 = vadd.f32 0.0, %v262
      %v264 = vpop.f32.mrf.mxu0
      %v265 = vadd.f32 0.0, %v264
      %266 = vdwg.mxu0
      %v269 = vunpack.c.l.b16 %v175
      %v270 = vunpack.c.l.b16 %v176
      %v271 = vpack.c.b16 %v270, %v269
      %273 = vst [vmem:[#allocation1] ss:$4 sm:$0xff] %v172
      %v274 = vld.sshfl [vmem:[#allocation1] sm:$0xff pattern:$0x73625140]
      %v275 = vld.sshfl [vmem:[#allocation1 + $0x8] sm:$0xff pattern:$0x73625140]
      %v276 = vld.sshfl [vmem:[#allocation1 + $0x10] sm:$0xff pattern:$0x73625140]
      %v278 = vsel %vm211, %v271, 0
      %v280 = vsel %vm215, %v274, 0
      %v282 = vsel %vm215, %v275, 0
      %v284 = vsel %vm215, %v276, 0
      %286 = vmatpush.bf16.msra.mxu0 0
      %287 = vmatpush.bf16.msra.mxu0 0
      %288 = vmatpush.bf16.msra.mxu0 0
      %289 = vmatpush.bf16.msra.mxu0 0
      %290 = vmatpush.bf16.msra.mxu0 0
      %291 = vmatpush.bf16.msra.mxu0 0
      %292 = vmatpush.bf16.msra.mxu0 0
      %293 = vmatpush.bf16.msra.mxu0 %v280
      %294 = vmatmul.bf16.gmra.mxu0 %v278
      %v295 = vpop.f32.mrf.mxu0
      %v296 = vadd.f32 %v235, %v295
      %v297 = vpop.f32.mrf.mxu0
      %v298 = vadd.f32 %v237, %v297
      %299 = vdwg.mxu0
      %300 = vmatpush.bf16.msra.mxu0 0
      %301 = vmatpush.bf16.msra.mxu0 0
      %302 = vmatpush.bf16.msra.mxu0 0
      %303 = vmatpush.bf16.msra.mxu0 0
      %304 = vmatpush.bf16.msra.mxu0 0
      %305 = vmatpush.bf16.msra.mxu0 0
      %306 = vmatpush.bf16.msra.mxu0 0
      %307 = vmatpush.bf16.msra.mxu0 %v282
      %308 = vmatmul.bf16.gmra.mxu0 %v278
      %v309 = vpop.f32.mrf.mxu0
      %v310 = vadd.f32 %v249, %v309
      %v311 = vpop.f32.mrf.mxu0
      %v312 = vadd.f32 %v251, %v311
      %313 = vdwg.mxu0
      %314 = vmatpush.bf16.msra.mxu0 0
      %315 = vmatpush.bf16.msra.mxu0 0
      %316 = vmatpush.bf16.msra.mxu0 0
      %317 = vmatpush.bf16.msra.mxu0 0
      %318 = vmatpush.bf16.msra.mxu0 0
      %319 = vmatpush.bf16.msra.mxu0 0
      %320 = vmatpush.bf16.msra.mxu0 0
      %321 = vmatpush.bf16.msra.mxu0 %v284
      %322 = vmatmul.bf16.gmra.mxu0 %v278
      %v323 = vpop.f32.mrf.mxu0
      %v324 = vadd.f32 %v263, %v323
      %v325 = vpop.f32.mrf.mxu0
      %v326 = vadd.f32 %v265, %v325
      %327 = vdwg.mxu0
      %328 = vst [vmem:[#allocation1] ss:$2 sm:$0xff] %v173
      %s329 = scalar_lea.vmem [#allocation1], 16
      %330 = vst [vmem:[%s329] ss:$2 sm:$0xff] %v174
      %v331 = vld.sshfl [vmem:[#allocation1] sm:$0xff pattern:$0x75316420]
      %v332 = vld.sshfl [vmem:[#allocation1 + $0x8] sm:$0xff pattern:$0x75316420]
      %v333 = vld.sshfl [vmem:[#allocation1 + $0x10] sm:$0xff pattern:$0x75316420]
      %337 = vrot.lane.b32.xlu0 %v331, 126
      %v338 = vpop.permute.xlu0 %337
      %339 = vrot.lane.b32.xlu0 %v332, 126
      %v340 = vpop.permute.xlu0 %339
      %341 = vrot.lane.b32.xlu0 %v333, 126
      %v342 = vpop.permute.xlu0 %341
      %vm343 = vcmp.lt.s32.totalorder %v195, 126
      %v344 = vsel %vm343, %v340, %v342
      %v345 = vsel %vm343, %v338, %v340
      %v346 = vsel %vm343, %v342, %v338
      %s347 = scalar_lea.vmem %s1, 16
      %v348 = vld [vmem:[%s347] sm:$0xf]
      %v349 = vld [vmem:[%s347 + $0x4] sm:$0xf]
      %v350 = vpack.c.bf16 %v345, %v345
      %v351 = vpack.c.bf16 %v344, %v344
      %v352 = vpack.c.bf16 %v346, %v346
      %v355 = vunpack.c.l.b16 %v348
      %v356 = vunpack.c.l.b16 %v349
      %v357 = vpack.c.b16 %v356, %v355
      %v359 = vsel %vm211, %v357, 0
      %v362 = vsel %vm215, %v350, 0
      %v365 = vsel %vm215, %v351, 0
      %v368 = vsel %vm215, %v352, 0
      %370 = vmatpush.bf16.msra.mxu0 0
      %371 = vmatpush.bf16.msra.mxu0 0
      %372 = vmatpush.bf16.msra.mxu0 0
      %373 = vmatpush.bf16.msra.mxu0 0
      %374 = vmatpush.bf16.msra.mxu0 0
      %375 = vmatpush.bf16.msra.mxu0 0
      %376 = vmatpush.bf16.msra.mxu0 0
      %377 = vmatpush.bf16.msra.mxu0 %v362
      %378 = vmatmul.bf16.gmra.mxu0 %v359
      %v379 = vpop.f32.mrf.mxu0
      %v380 = vadd.f32 0.0, %v379
      %v381 = vpop.f32.mrf.mxu0
      %v382 = vadd.f32 0.0, %v381
      %383 = vdwg.mxu0
      %384 = vmatpush.bf16.msra.mxu0 0
      %385 = vmatpush.bf16.msra.mxu0 0
      %386 = vmatpush.bf16.msra.mxu0 0
      %387 = vmatpush.bf16.msra.mxu0 0
      %388 = vmatpush.bf16.msra.mxu0 0
      %389 = vmatpush.bf16.msra.mxu0 0
      %390 = vmatpush.bf16.msra.mxu0 0
      %391 = vmatpush.bf16.msra.mxu0 %v365
      %392 = vmatmul.bf16.gmra.mxu0 %v359
      %v393 = vpop.f32.mrf.mxu0
      %v394 = vadd.f32 0.0, %v393
      %v395 = vpop.f32.mrf.mxu0
      %v396 = vadd.f32 0.0, %v395
      %397 = vdwg.mxu0
      %398 = vmatpush.bf16.msra.mxu0 0
      %399 = vmatpush.bf16.msra.mxu0 0
      %400 = vmatpush.bf16.msra.mxu0 0
      %401 = vmatpush.bf16.msra.mxu0 0
      %402 = vmatpush.bf16.msra.mxu0 0
      %403 = vmatpush.bf16.msra.mxu0 0
      %404 = vmatpush.bf16.msra.mxu0 0
      %405 = vmatpush.bf16.msra.mxu0 %v368
      %406 = vmatmul.bf16.gmra.mxu0 %v359
      %v407 = vpop.f32.mrf.mxu0
      %v408 = vadd.f32 0.0, %v407
      %v409 = vpop.f32.mrf.mxu0
      %v410 = vadd.f32 0.0, %v409
      %411 = vdwg.mxu0
      %v412 = vadd.f32 %v296, %v380
      %v413 = vadd.f32 %v310, %v394
      %v414 = vadd.f32 %v324, %v408
      %v415 = vadd.f32 %v298, %v382
      %v416 = vadd.f32 %v312, %v396
      %v417 = vadd.f32 %v326, %v410
      %418 = vst [vmem:[#allocation1] ss:$2 sm:$0xff] %v173
      %s419 = scalar_lea.vmem [#allocation1], 16
      %420 = vst [vmem:[%s419] ss:$2 sm:$0xff] %v174
      %v421 = vld.sshfl [vmem:[#allocation1] sm:$0xff pattern:$0x75316420]
      %v422 = vld.sshfl [vmem:[#allocation1 + $0x8] sm:$0xff pattern:$0x75316420]
      %v423 = vld.sshfl [vmem:[#allocation1 + $0x10] sm:$0xff pattern:$0x75316420]
      %427 = vrot.lane.b32.xlu0 %v421, 110
      %v428 = vpop.permute.xlu0 %427
      %429 = vrot.lane.b32.xlu0 %v422, 110
      %v430 = vpop.permute.xlu0 %429
      %431 = vrot.lane.b32.xlu0 %v423, 110
      %v432 = vpop.permute.xlu0 %431
      %vm433 = vcmp.lt.s32.totalorder %v195, 110
      %v434 = vsel %vm433, %v430, %v432
      %v435 = vsel %vm433, %v428, %v430
      %v436 = vsel %vm433, %v432, %v428
      %s437 = scalar_lea.vmem %s1, 24
      %v438 = vld [vmem:[%s437] sm:$0xf]
      %v439 = vld [vmem:[%s437 + $0x4] sm:$0xf]
      %v440 = vpack.c.bf16 %v435, %v435
      %v441 = vpack.c.bf16 %v434, %v434
      %v442 = vpack.c.bf16 %v436, %v436
      %v445 = vunpack.c.l.b16 %v438
      %v446 = vunpack.c.l.b16 %v439
      %v447 = vpack.c.b16 %v446, %v445
      %v449 = vsel %vm211, %v447, 0
      %v452 = vsel %vm215, %v440, 0
      %v455 = vsel %vm215, %v441, 0
      %v458 = vsel %vm215, %v442, 0
      %460 = vmatpush.bf16.msra.mxu0 0
      %461 = vmatpush.bf16.msra.mxu0 0
      %462 = vmatpush.bf16.msra.mxu0 0
      %463 = vmatpush.bf16.msra.mxu0 0
      %464 = vmatpush.bf16.msra.mxu0 0
      %465 = vmatpush.bf16.msra.mxu0 0
      %466 = vmatpush.bf16.msra.mxu0 0
      %467 = vmatpush.bf16.msra.mxu0 %v452
      %468 = vmatmul.bf16.gmra.mxu0 %v449
      %v469 = vpop.f32.mrf.mxu0
      %v470 = vadd.f32 0.0, %v469
      %v471 = vpop.f32.mrf.mxu0
      %v472 = vadd.f32 0.0, %v471
      %473 = vdwg.mxu0
      %474 = vmatpush.bf16.msra.mxu0 0
      %475 = vmatpush.bf16.msra.mxu0 0
      %476 = vmatpush.bf16.msra.mxu0 0
      %477 = vmatpush.bf16.msra.mxu0 0
      %478 = vmatpush.bf16.msra.mxu0 0
      %479 = vmatpush.bf16.msra.mxu0 0
      %480 = vmatpush.bf16.msra.mxu0 0
      %481 = vmatpush.bf16.msra.mxu0 %v455
      %482 = vmatmul.bf16.gmra.mxu0 %v449
      %v483 = vpop.f32.mrf.mxu0
      %v484 = vadd.f32 0.0, %v483
      %v485 = vpop.f32.mrf.mxu0
      %v486 = vadd.f32 0.0, %v485
      %487 = vdwg.mxu0
      %488 = vmatpush.bf16.msra.mxu0 0
      %489 = vmatpush.bf16.msra.mxu0 0
      %490 = vmatpush.bf16.msra.mxu0 0
      %491 = vmatpush.bf16.msra.mxu0 0
      %492 = vmatpush.bf16.msra.mxu0 0
      %493 = vmatpush.bf16.msra.mxu0 0
      %494 = vmatpush.bf16.msra.mxu0 0
      %495 = vmatpush.bf16.msra.mxu0 %v458
      %496 = vmatmul.bf16.gmra.mxu0 %v449
      %v497 = vpop.f32.mrf.mxu0
      %v498 = vadd.f32 0.0, %v497
      %v499 = vpop.f32.mrf.mxu0
      %v500 = vadd.f32 0.0, %v499
      %501 = vdwg.mxu0
      %v502 = vadd.f32 %v412, %v470
      %v503 = vadd.f32 %v413, %v484
      %v504 = vadd.f32 %v414, %v498
      %v505 = vadd.f32 %v415, %v472
      %v506 = vadd.f32 %v416, %v486
      %v507 = vadd.f32 %v417, %v500
      %508 = vst [vmem:[#allocation1] ss:$2 sm:$0xff] %v173
      %s509 = scalar_lea.vmem [#allocation1], 16
      %510 = vst [vmem:[%s509] ss:$2 sm:$0xff] %v174
      %v511 = vld.sshfl [vmem:[#allocation1] sm:$0xff pattern:$0x75316420]
      %v512 = vld.sshfl [vmem:[#allocation1 + $0x8] sm:$0xff pattern:$0x75316420]
      %v513 = vld.sshfl [vmem:[#allocation1 + $0x10] sm:$0xff pattern:$0x75316420]
      %517 = vrot.lane.b32.xlu0 %v511, 109
      %v518 = vpop.permute.xlu0 %517
      %519 = vrot.lane.b32.xlu0 %v512, 109
      %v520 = vpop.permute.xlu0 %519
      %521 = vrot.lane.b32.xlu0 %v513, 109
      %v522 = vpop.permute.xlu0 %521
      %vm523 = vcmp.lt.s32.totalorder %v195, 109
      %v524 = vsel %vm523, %v520, %v522
      %v525 = vsel %vm523, %v518, %v520
      %v526 = vsel %vm523, %v522, %v518
      %s527 = scalar_lea.vmem %s1, 32
      %v528 = vld [vmem:[%s527] sm:$0xf]
      %v529 = vld [vmem:[%s527 + $0x4] sm:$0xf]
      %v530 = vpack.c.bf16 %v525, %v525
      %v531 = vpack.c.bf16 %v524, %v524
      %v532 = vpack.c.bf16 %v526, %v526
      %v535 = vunpack.c.l.b16 %v528
      %v536 = vunpack.c.l.b16 %v529
      %v537 = vpack.c.b16 %v536, %v535
      %v539 = vsel %vm211, %v537, 0
      %v542 = vsel %vm215, %v530, 0
      %v545 = vsel %vm215, %v531, 0
      %v548 = vsel %vm215, %v532, 0
      %550 = vmatpush.bf16.msra.mxu0 0
      %551 = vmatpush.bf16.msra.mxu0 0
      %552 = vmatpush.bf16.msra.mxu0 0
      %553 = vmatpush.bf16.msra.mxu0 0
      %554 = vmatpush.bf16.msra.mxu0 0
      %555 = vmatpush.bf16.msra.mxu0 0
      %556 = vmatpush.bf16.msra.mxu0 0
      %557 = vmatpush.bf16.msra.mxu0 %v542
      %558 = vmatmul.bf16.gmra.mxu0 %v539
      %v559 = vpop.f32.mrf.mxu0
      %v560 = vadd.f32 0.0, %v559
      %v561 = vpop.f32.mrf.mxu0
      %v562 = vadd.f32 0.0, %v561
      %563 = vdwg.mxu0
      %564 = vmatpush.bf16.msra.mxu0 0
      %565 = vmatpush.bf16.msra.mxu0 0
      %566 = vmatpush.bf16.msra.mxu0 0
      %567 = vmatpush.bf16.msra.mxu0 0
      %568 = vmatpush.bf16.msra.mxu0 0
      %569 = vmatpush.bf16.msra.mxu0 0
      %570 = vmatpush.bf16.msra.mxu0 0
      %571 = vmatpush.bf16.msra.mxu0 %v545
      %572 = vmatmul.bf16.gmra.mxu0 %v539
      %v573 = vpop.f32.mrf.mxu0
      %v574 = vadd.f32 0.0, %v573
      %v575 = vpop.f32.mrf.mxu0
      %v576 = vadd.f32 0.0, %v575
      %577 = vdwg.mxu0
      %578 = vmatpush.bf16.msra.mxu0 0
      %579 = vmatpush.bf16.msra.mxu0 0
      %580 = vmatpush.bf16.msra.mxu0 0
      %581 = vmatpush.bf16.msra.mxu0 0
      %582 = vmatpush.bf16.msra.mxu0 0
      %583 = vmatpush.bf16.msra.mxu0 0
      %584 = vmatpush.bf16.msra.mxu0 0
      %585 = vmatpush.bf16.msra.mxu0 %v548
      %586 = vmatmul.bf16.gmra.mxu0 %v539
      %v587 = vpop.f32.mrf.mxu0
      %v588 = vadd.f32 0.0, %v587
      %v589 = vpop.f32.mrf.mxu0
      %v590 = vadd.f32 0.0, %v589
      %591 = vdwg.mxu0
      %v592 = vadd.f32 %v502, %v560
      %v593 = vadd.f32 %v503, %v574
      %v594 = vadd.f32 %v504, %v588
      %v595 = vadd.f32 %v505, %v562
      %v596 = vadd.f32 %v506, %v576
      %v597 = vadd.f32 %v507, %v590
      %598 = vst [vmem:[#allocation1] ss:$2 sm:$0xff] %v173
      %s599 = scalar_lea.vmem [#allocation1], 16
      %600 = vst [vmem:[%s599] ss:$2 sm:$0xff] %v174
      %v601 = vld.sshfl [vmem:[#allocation1] sm:$0xff pattern:$0x75316420]
      %v602 = vld.sshfl [vmem:[#allocation1 + $0x8] sm:$0xff pattern:$0x75316420]
      %v603 = vld.sshfl [vmem:[#allocation1 + $0x10] sm:$0xff pattern:$0x75316420]
      %607 = vrot.lane.b32.xlu0 %v601, 108
      %v608 = vpop.permute.xlu0 %607
      %609 = vrot.lane.b32.xlu0 %v602, 108
      %v610 = vpop.permute.xlu0 %609
      %611 = vrot.lane.b32.xlu0 %v603, 108
      %v612 = vpop.permute.xlu0 %611
      %vm613 = vcmp.lt.s32.totalorder %v195, 108
      %v614 = vsel %vm613, %v610, %v612
      %v615 = vsel %vm613, %v608, %v610
      %v616 = vsel %vm613, %v612, %v608
      %s617 = scalar_lea.vmem %s1, 40
      %v618 = vld [vmem:[%s617] sm:$0xf]
      %v619 = vld [vmem:[%s617 + $0x4] sm:$0xf]
      %v620 = vpack.c.bf16 %v615, %v615
      %v621 = vpack.c.bf16 %v614, %v614
      %v622 = vpack.c.bf16 %v616, %v616
      %v625 = vunpack.c.l.b16 %v618
      %v626 = vunpack.c.l.b16 %v619
      %v627 = vpack.c.b16 %v626, %v625
      %v629 = vsel %vm211, %v627, 0
      %v632 = vsel %vm215, %v620, 0
      %v635 = vsel %vm215, %v621, 0
      %v638 = vsel %vm215, %v622, 0
      %640 = vmatpush.bf16.msra.mxu0 0
      %641 = vmatpush.bf16.msra.mxu0 0
      %642 = vmatpush.bf16.msra.mxu0 0
      %643 = vmatpush.bf16.msra.mxu0 0
      %644 = vmatpush.bf16.msra.mxu0 0
      %645 = vmatpush.bf16.msra.mxu0 0
      %646 = vmatpush.bf16.msra.mxu0 0
      %647 = vmatpush.bf16.msra.mxu0 %v632
      %648 = vmatmul.bf16.gmra.mxu0 %v629
      %v649 = vpop.f32.mrf.mxu0
      %v650 = vadd.f32 0.0, %v649
      %v651 = vpop.f32.mrf.mxu0
      %v652 = vadd.f32 0.0, %v651
      %653 = vdwg.mxu0
      %654 = vmatpush.bf16.msra.mxu0 0
      %655 = vmatpush.bf16.msra.mxu0 0
      %656 = vmatpush.bf16.msra.mxu0 0
      %657 = vmatpush.bf16.msra.mxu0 0
      %658 = vmatpush.bf16.msra.mxu0 0
      %659 = vmatpush.bf16.msra.mxu0 0
      %660 = vmatpush.bf16.msra.mxu0 0
      %661 = vmatpush.bf16.msra.mxu0 %v635
      %662 = vmatmul.bf16.gmra.mxu0 %v629
      %v663 = vpop.f32.mrf.mxu0
      %v664 = vadd.f32 0.0, %v663
      %v665 = vpop.f32.mrf.mxu0
      %v666 = vadd.f32 0.0, %v665
      %667 = vdwg.mxu0
      %668 = vmatpush.bf16.msra.mxu0 0
      %669 = vmatpush.bf16.msra.mxu0 0
      %670 = vmatpush.bf16.msra.mxu0 0
      %671 = vmatpush.bf16.msra.mxu0 0
      %672 = vmatpush.bf16.msra.mxu0 0
      %673 = vmatpush.bf16.msra.mxu0 0
      %674 = vmatpush.bf16.msra.mxu0 0
      %675 = vmatpush.bf16.msra.mxu0 %v638
      %676 = vmatmul.bf16.gmra.mxu0 %v629
      %v677 = vpop.f32.mrf.mxu0
      %v678 = vadd.f32 0.0, %v677
      %v679 = vpop.f32.mrf.mxu0
      %v680 = vadd.f32 0.0, %v679
      %681 = vdwg.mxu0
      %v682 = vadd.f32 %v592, %v650
      %v683 = vadd.f32 %v593, %v664
      %v684 = vadd.f32 %v594, %v678
      %v685 = vadd.f32 %v595, %v652
      %v686 = vadd.f32 %v596, %v666
      %v687 = vadd.f32 %v597, %v680
      %688 = vst [vmem:[#allocation1] ss:$2 sm:$0xff] %v173
      %s689 = scalar_lea.vmem [#allocation1], 16
      %690 = vst [vmem:[%s689] ss:$2 sm:$0xff] %v174
      %v691 = vld.sshfl [vmem:[#allocation1] sm:$0xff pattern:$0x75316420]
      %v692 = vld.sshfl [vmem:[#allocation1 + $0x8] sm:$0xff pattern:$0x75316420]
      %v693 = vld.sshfl [vmem:[#allocation1 + $0x10] sm:$0xff pattern:$0x75316420]
      %697 = vrot.lane.b32.xlu0 %v691, 92
      %v698 = vpop.permute.xlu0 %697
      %699 = vrot.lane.b32.xlu0 %v692, 92
      %v700 = vpop.permute.xlu0 %699
      %701 = vrot.lane.b32.xlu0 %v693, 92
      %v702 = vpop.permute.xlu0 %701
      %vm703 = vcmp.lt.s32.totalorder %v195, 92
      %v704 = vsel %vm703, %v700, %v702
      %v705 = vsel %vm703, %v698, %v700
      %v706 = vsel %vm703, %v702, %v698
      %s707 = scalar_lea.vmem %s1, 48
      %v708 = vld [vmem:[%s707] sm:$0xf]
      %v709 = vld [vmem:[%s707 + $0x4] sm:$0xf]
      %v710 = vpack.c.bf16 %v705, %v705
      %v711 = vpack.c.bf16 %v704, %v704
      %v712 = vpack.c.bf16 %v706, %v706
      %v715 = vunpack.c.l.b16 %v708
      %v716 = vunpack.c.l.b16 %v709
      %v717 = vpack.c.b16 %v716, %v715
      %v719 = vsel %vm211, %v717, 0
      %v722 = vsel %vm215, %v710, 0
      %v725 = vsel %vm215, %v711, 0
      %v728 = vsel %vm215, %v712, 0
      %730 = vmatpush.bf16.msra.mxu0 0
      %731 = vmatpush.bf16.msra.mxu0 0
      %732 = vmatpush.bf16.msra.mxu0 0
      %733 = vmatpush.bf16.msra.mxu0 0
      %734 = vmatpush.bf16.msra.mxu0 0
      %735 = vmatpush.bf16.msra.mxu0 0
      %736 = vmatpush.bf16.msra.mxu0 0
      %737 = vmatpush.bf16.msra.mxu0 %v722
      %738 = vmatmul.bf16.gmra.mxu0 %v719
      %v739 = vpop.f32.mrf.mxu0
      %v740 = vadd.f32 0.0, %v739
      %v741 = vpop.f32.mrf.mxu0
      %v742 = vadd.f32 0.0, %v741
      %743 = vdwg.mxu0
      %744 = vmatpush.bf16.msra.mxu0 0
      %745 = vmatpush.bf16.msra.mxu0 0
      %746 = vmatpush.bf16.msra.mxu0 0
      %747 = vmatpush.bf16.msra.mxu0 0
      %748 = vmatpush.bf16.msra.mxu0 0
      %749 = vmatpush.bf16.msra.mxu0 0
      %750 = vmatpush.bf16.msra.mxu0 0
      %751 = vmatpush.bf16.msra.mxu0 %v725
      %752 = vmatmul.bf16.gmra.mxu0 %v719
      %v753 = vpop.f32.mrf.mxu0
      %v754 = vadd.f32 0.0, %v753
      %v755 = vpop.f32.mrf.mxu0
      %v756 = vadd.f32 0.0, %v755
      %757 = vdwg.mxu0
      %758 = vmatpush.bf16.msra.mxu0 0
      %759 = vmatpush.bf16.msra.mxu0 0
      %760 = vmatpush.bf16.msra.mxu0 0
      %761 = vmatpush.bf16.msra.mxu0 0
      %762 = vmatpush.bf16.msra.mxu0 0
      %763 = vmatpush.bf16.msra.mxu0 0
      %764 = vmatpush.bf16.msra.mxu0 0
      %765 = vmatpush.bf16.msra.mxu0 %v728
      %766 = vmatmul.bf16.gmra.mxu0 %v719
      %v767 = vpop.f32.mrf.mxu0
      %v768 = vadd.f32 0.0, %v767
      %v769 = vpop.f32.mrf.mxu0
      %v770 = vadd.f32 0.0, %v769
      %771 = vdwg.mxu0
      %v772 = vadd.f32 %v682, %v740
      %v773 = vadd.f32 %v683, %v754
      %v774 = vadd.f32 %v684, %v768
      %v775 = vadd.f32 %v685, %v742
      %v776 = vadd.f32 %v686, %v756
      %v777 = vadd.f32 %v687, %v770
      %778 = vst [vmem:[#allocation1] ss:$2 sm:$0xff] %v173
      %s779 = scalar_lea.vmem [#allocation1], 16
      %780 = vst [vmem:[%s779] ss:$2 sm:$0xff] %v174
      %v781 = vld.sshfl [vmem:[#allocation1] sm:$0xff pattern:$0x75316420]
      %v782 = vld.sshfl [vmem:[#allocation1 + $0x8] sm:$0xff pattern:$0x75316420]
      %v783 = vld.sshfl [vmem:[#allocation1 + $0x10] sm:$0xff pattern:$0x75316420]
      %787 = vrot.lane.b32.xlu0 %v781, 91
      %v788 = vpop.permute.xlu0 %787
      %789 = vrot.lane.b32.xlu0 %v782, 91
      %v790 = vpop.permute.xlu0 %789
      %791 = vrot.lane.b32.xlu0 %v783, 91
      %v792 = vpop.permute.xlu0 %791
      %vm793 = vcmp.lt.s32.totalorder %v195, 91
      %v794 = vsel %vm793, %v790, %v792
      %v795 = vsel %vm793, %v788, %v790
      %v796 = vsel %vm793, %v792, %v788
      %s797 = scalar_lea.vmem %s1, 56
      %v798 = vld [vmem:[%s797] sm:$0xf]
      %v799 = vld [vmem:[%s797 + $0x4] sm:$0xf]
      %v800 = vpack.c.bf16 %v795, %v795
      %v801 = vpack.c.bf16 %v794, %v794
      %v802 = vpack.c.bf16 %v796, %v796
      %v805 = vunpack.c.l.b16 %v798
      %v806 = vunpack.c.l.b16 %v799
      %v807 = vpack.c.b16 %v806, %v805
      %v809 = vsel %vm211, %v807, 0
      %v812 = vsel %vm215, %v800, 0
      %v815 = vsel %vm215, %v801, 0
      %v818 = vsel %vm215, %v802, 0
      %820 = vmatpush.bf16.msra.mxu0 0
      %821 = vmatpush.bf16.msra.mxu0 0
      %822 = vmatpush.bf16.msra.mxu0 0
      %823 = vmatpush.bf16.msra.mxu0 0
      %824 = vmatpush.bf16.msra.mxu0 0
      %825 = vmatpush.bf16.msra.mxu0 0
      %826 = vmatpush.bf16.msra.mxu0 0
      %827 = vmatpush.bf16.msra.mxu0 %v812
      %828 = vmatmul.bf16.gmra.mxu0 %v809
      %v829 = vpop.f32.mrf.mxu0
      %v830 = vadd.f32 0.0, %v829
      %v831 = vpop.f32.mrf.mxu0
      %v832 = vadd.f32 0.0, %v831
      %833 = vdwg.mxu0
      %834 = vmatpush.bf16.msra.mxu0 0
      %835 = vmatpush.bf16.msra.mxu0 0
      %836 = vmatpush.bf16.msra.mxu0 0
      %837 = vmatpush.bf16.msra.mxu0 0
      %838 = vmatpush.bf16.msra.mxu0 0
      %839 = vmatpush.bf16.msra.mxu0 0
      %840 = vmatpush.bf16.msra.mxu0 0
      %841 = vmatpush.bf16.msra.mxu0 %v815
      %842 = vmatmul.bf16.gmra.mxu0 %v809
      %v843 = vpop.f32.mrf.mxu0
      %v844 = vadd.f32 0.0, %v843
      %v845 = vpop.f32.mrf.mxu0
      %v846 = vadd.f32 0.0, %v845
      %847 = vdwg.mxu0
      %848 = vmatpush.bf16.msra.mxu0 0
      %849 = vmatpush.bf16.msra.mxu0 0
      %850 = vmatpush.bf16.msra.mxu0 0
      %851 = vmatpush.bf16.msra.mxu0 0
      %852 = vmatpush.bf16.msra.mxu0 0
      %853 = vmatpush.bf16.msra.mxu0 0
      %854 = vmatpush.bf16.msra.mxu0 0
      %855 = vmatpush.bf16.msra.mxu0 %v818
      %856 = vmatmul.bf16.gmra.mxu0 %v809
      %v857 = vpop.f32.mrf.mxu0
      %v858 = vadd.f32 0.0, %v857
      %v859 = vpop.f32.mrf.mxu0
      %v860 = vadd.f32 0.0, %v859
      %861 = vdwg.mxu0
      %v862 = vadd.f32 %v772, %v830
      %v863 = vadd.f32 %v773, %v844
      %v864 = vadd.f32 %v774, %v858
      %v865 = vadd.f32 %v775, %v832
      %v866 = vadd.f32 %v776, %v846
      %v867 = vadd.f32 %v777, %v860
      %868 = vst [vmem:[#allocation1] ss:$2 sm:$0xff] %v173
      %s869 = scalar_lea.vmem [#allocation1], 16
      %870 = vst [vmem:[%s869] ss:$2 sm:$0xff] %v174
      %v871 = vld.sshfl [vmem:[#allocation1] sm:$0xff pattern:$0x75316420]
      %v872 = vld.sshfl [vmem:[#allocation1 + $0x8] sm:$0xff pattern:$0x75316420]
      %v873 = vld.sshfl [vmem:[#allocation1 + $0x10] sm:$0xff pattern:$0x75316420]
      %877 = vrot.lane.b32.xlu0 %v871, 90
      %v878 = vpop.permute.xlu0 %877
      %879 = vrot.lane.b32.xlu0 %v872, 90
      %v880 = vpop.permute.xlu0 %879
      %881 = vrot.lane.b32.xlu0 %v873, 90
      %v882 = vpop.permute.xlu0 %881
      %vm883 = vcmp.lt.s32.totalorder %v195, 90
      %v884 = vsel %vm883, %v880, %v882
      %v885 = vsel %vm883, %v878, %v880
      %v886 = vsel %vm883, %v882, %v878
      %s887 = scalar_lea.vmem %s1, 64
      %v888 = vld [vmem:[%s887] sm:$0xf]
      %v889 = vld [vmem:[%s887 + $0x4] sm:$0xf]
      %v890 = vpack.c.bf16 %v885, %v885
      %v891 = vpack.c.bf16 %v884, %v884
      %v892 = vpack.c.bf16 %v886, %v886
      %v895 = vunpack.c.l.b16 %v888
      %v896 = vunpack.c.l.b16 %v889
      %v897 = vpack.c.b16 %v896, %v895
      %v899 = vsel %vm211, %v897, 0
      %v902 = vsel %vm215, %v890, 0
      %v905 = vsel %vm215, %v891, 0
      %v908 = vsel %vm215, %v892, 0
      %910 = vmatpush.bf16.msra.mxu0 0
      %911 = vmatpush.bf16.msra.mxu0 0
      %912 = vmatpush.bf16.msra.mxu0 0
      %913 = vmatpush.bf16.msra.mxu0 0
      %914 = vmatpush.bf16.msra.mxu0 0
      %915 = vmatpush.bf16.msra.mxu0 0
      %916 = vmatpush.bf16.msra.mxu0 0
      %917 = vmatpush.bf16.msra.mxu0 %v902
      %918 = vmatmul.bf16.gmra.mxu0 %v899
      %v919 = vpop.f32.mrf.mxu0
      %v920 = vadd.f32 0.0, %v919
      %v921 = vpop.f32.mrf.mxu0
      %v922 = vadd.f32 0.0, %v921
      %923 = vdwg.mxu0
      %924 = vmatpush.bf16.msra.mxu0 0
      %925 = vmatpush.bf16.msra.mxu0 0
      %926 = vmatpush.bf16.msra.mxu0 0
      %927 = vmatpush.bf16.msra.mxu0 0
      %928 = vmatpush.bf16.msra.mxu0 0
      %929 = vmatpush.bf16.msra.mxu0 0
      %930 = vmatpush.bf16.msra.mxu0 0
      %931 = vmatpush.bf16.msra.mxu0 %v905
      %932 = vmatmul.bf16.gmra.mxu0 %v899
      %v933 = vpop.f32.mrf.mxu0
      %v934 = vadd.f32 0.0, %v933
      %v935 = vpop.f32.mrf.mxu0
      %v936 = vadd.f32 0.0, %v935
      %937 = vdwg.mxu0
      %938 = vmatpush.bf16.msra.mxu0 0
      %939 = vmatpush.bf16.msra.mxu0 0
      %940 = vmatpush.bf16.msra.mxu0 0
      %941 = vmatpush.bf16.msra.mxu0 0
      %942 = vmatpush.bf16.msra.mxu0 0
      %943 = vmatpush.bf16.msra.mxu0 0
      %944 = vmatpush.bf16.msra.mxu0 0
      %945 = vmatpush.bf16.msra.mxu0 %v908
      %946 = vmatmul.bf16.gmra.mxu0 %v899
      %v947 = vpop.f32.mrf.mxu0
      %v948 = vadd.f32 0.0, %v947
      %v949 = vpop.f32.mrf.mxu0
      %v950 = vadd.f32 0.0, %v949
      %951 = vdwg.mxu0
      %v952 = vadd.f32 %v862, %v920
      %v953 = vadd.f32 %v863, %v934
      %v954 = vadd.f32 %v864, %v948
      %v955 = vadd.f32 %v865, %v922
      %v956 = vadd.f32 %v866, %v936
      %v957 = vadd.f32 %v867, %v950
      %v958 = vld [vmem:[%s2] sm:$0xff]
      %v959 = vld [vmem:[%s2 + $0x8] sm:$0xff]
      %961 = vset.pattern.permute.xlu0 0
      %962 = vperm.xlu0 %961, %v958
      %v963 = vpop.permute.xlu0 %962
      %966 = vset.pattern.permute.xlu0 0
      %967 = vperm.xlu0 %966, %v959
      %v968 = vpop.permute.xlu0 %967
      %v970 = vadd.f32 %v952, %v963
      %v971 = vadd.f32 %v953, %v963
      %v972 = vadd.f32 %v954, %v963
      %v973 = vadd.f32 %v955, %v968
      %v974 = vadd.f32 %v956, %v968
      %v975 = vadd.f32 %v957, %v968
      %v976 = vmax.f32 %v970, 0.0
      %v977 = vmax.f32 %v971, 0.0
      %v978 = vmax.f32 %v972, 0.0
      %v979 = vmax.f32 %v973, 0.0
      %v980 = vmax.f32 %v974, 0.0
      %v981 = vmax.f32 %v975, 0.0
      %982 = vst [vmem:[%s170] sm:$0xff] %v976
      %983 = vst [vmem:[%s170 + $0x8] sm:$0xff] %v977
      %984 = vst [vmem:[%s170 + $0x10] sm:$0xff] %v978
      %985 = vst [vmem:[%s170 + $0x18] sm:$0xff] %v979
      %986 = vst [vmem:[%s170 + $0x20] sm:$0xff] %v980
      %987 = vst [vmem:[%s170 + $0x28] sm:$0xff] %v981
      %p988 = scmp.lt.s32.totalorder %s14, 1
      %s989 = scalar_select %p988, %s14, 1
      %s990 = smul.addr %s989, 6
      %s991 = smul.addr %s990, 8
      %s992 = scalar_lea.vmem %s3, %s991
      // Predicated region
      $region33: #{residual_block_forward.1} parent=31 // pred_check
        %p993 = pneg %p100
      $region34: #{residual_block_forward.1} parent=31 // pred_check_branch
        %995 = sbr.rel (%p993) target = $region36
      $region35: #{residual_block_forward.1} parent=31 // pred_region
        _
      $region36: #{residual_block_forward.1} parent=31 // pred_fallthru
        _
    $region32: #{residual_block_forward.1} parent=5 // pred_fallthru
      _
    %p996 = scmp.le.s32.totalorder 2, %s9
    // Predicated region
    $region37: #{residual_block_forward.1} parent=5 // pred_check
      %p997 = pneg %p996
    $region38: #{residual_block_forward.1} parent=5 // pred_check_branch
      %999 = sbr.rel (%p997) target = $region40
    $region39: #{residual_block_forward.1} parent=5 // pred_region
      %s1000 = ssub.s32 %s9, 2
      // Predicated region
      $region41: #{residual_block_forward.1} parent=39 // pred_check
        %p1001 = pneg %p106
      $region42: #{residual_block_forward.1} parent=39 // pred_check_branch
        %1003 = sbr.rel (%p1001) target = $region44
      $region43: #{residual_block_forward.1} parent=39 // pred_region
        %p1004 = scmp.lt.s32.totalorder %s15, 1
        %s1005 = scalar_select %p1004, %s15, 1
        %s1006 = smul.addr %s1005, 6
        %s1007 = smul.addr %s1006, 8
        %s1008 = scalar_lea.vmem %s3, %s1007
      $region44: #{residual_block_forward.1} parent=39 // pred_fallthru
        _
    $region40: #{residual_block_forward.1} parent=5 // pred_fallthru
      _
  $region6: #{residual_block_forward.1} parent=0 // loop_footer
    %s13 = sadd.s32 1, %s9
  $region7: #{residual_block_forward.1} parent=0 // loop_footer_branch
    %8 = sbr.rel target = $region3
  $region8: #{residual_block_forward.1} parent=0 // loop_exit
    _

</llo_original>
